<compile_context>
chip_gen: v7x
topology: tpu7x:2x2x1
jax: 0.10.0
libtpu: 0.0.40
codegen_flags: <defaults>
</compile_context>

<pallas_src>
import functools
import math

import jax
import jax.numpy as jnp
from jax.experimental import pallas as pl
from jax.experimental.pallas import tpu as pltpu

# NOTE: the original module hard-codes d_k = 64 for the 1/sqrt(d_k) scaling,
# independent of the actual tensor shapes — reproduced exactly here, so the
# kernel intentionally diverges from "standard" SDPA whenever Dk != 64.
D_K_SCALE = 64

_TILE_VMEM_BUDGET = 24 * 1024 * 1024  # conservative tile budget across v5e/v6e/v7x


def _lane_pad(d, lane=128):
    return -(-d // lane) * lane


def _estimate_vmem_bytes(g, tq, s, dk, dv, in_bytes=4):
    """Rough VMEM footprint: double-buffered pipeline blocks + kernel temporaries."""
    dk_p, dv_p, s_p = _lane_pad(dk), _lane_pad(dv), _lane_pad(s)
    # double-buffered q/k/v input blocks and output block
    blocks = 2 * in_bytes * g * (tq * dk_p + s * dk_p + s * dv_p + tq * dv_p)
    # temporaries: f32 scores + f32 exp + bf16 exp copy over (g, tq, s)
    tmp = g * tq * s_p * (4 + 4 + 2)
    # bf16 copies of q/k/v operands
    tmp += 2 * g * (tq * dk_p + s * dk_p + s * dv_p)
    # f32 context accumulator
    tmp += 4 * g * tq * dv_p
    return blocks + tmp


def _vmem_limit_bytes(est):
    limit = int(est * 1.4)                    # headroom for compiler scratch/spill
    limit = max(limit, 32 * 1024 * 1024)
    limit = min(limit, 56 * 1024 * 1024)      # stay under v7x 64 MiB physical/TC
    return limit


def _pick_q_tile(s, max_tq=512):
    """Query tile: full S if small, else the largest divisor <= max_tq that keeps
    the (8,128) sublane constraint (multiple of 8)."""
    if s <= max_tq:
        return s
    for t in range(max_tq, 7, -8):
        if s % t == 0:
            return t
    return s  # full dim is always a legal block size


def _pick_head_group(bh, s, tq, dk, dv, budget_bytes):
    """Largest divisor of B*H whose working set fits the VMEM budget, preferring
    >=4 total grid steps (>=2 per TensorCore on v7x) and an even step count."""
    n_qt = s // tq
    best_g, best_key = 1, None
    for g in range(1, bh + 1):
        if bh % g:
            continue
        if _estimate_vmem_bytes(g, tq, s, dk, dv) > budget_bytes:
            continue
        steps = (bh // g) * n_qt
        key = (steps >= 4, steps % 2 == 0, g)
        if best_key is None or key > best_key:
            best_g, best_key = g, key
    return best_g


def _sdpa_kernel(q_ref, k_ref, v_ref, o_ref, *, matmul_dtype, approx_recip):
    # q_ref: (G, tq, Dk), k_ref: (G, S, Dk), v_ref: (G, S, Dv), o_ref: (G, tq, Dv)
    scale = 1.0 / math.sqrt(D_K_SCALE)
    # Fold scale into Q (G*tq*Dk elements, not G*tq*S), then cast MXU operands.
    q = (q_ref[...] * scale).astype(matmul_dtype)
    k = k_ref[...].astype(matmul_dtype)

    # scores = (Q*scale) @ K^T, contracting the last axes so K is fed to the MXU
    # in its natural [S, Dk] layout (no transpose); bf16 operands, f32 accumulate.
    scores = jnp.einsum(
        "gqd,gkd->gqk", q, k, preferred_element_type=jnp.float32
    )  # (G, tq, S) f32

    # Numerically-stable softmax; statistics in f32, normalization deferred.
    m = jnp.max(scores, axis=-1, keepdims=True)
    e = jnp.exp(scores - m)
    denom = jnp.sum(e, axis=-1, keepdims=True)  # (G, tq, 1)

    ctx = jnp.einsum(
        "gqk,gkd->gqd",
        e.astype(matmul_dtype),
        v_ref[...].astype(matmul_dtype),
        preferred_element_type=jnp.float32,
    )  # (G, tq, Dv) f32

    # Normalize the context (G*tq*Dv) instead of the probabilities (G*tq*S).
    ctx = ctx * pl.reciprocal(denom, approx=approx_recip)
    o_ref[...] = ctx.astype(o_ref.dtype)


def scaled_dot_product_attention(Q, K, V, *, matmul_dtype=jnp.bfloat16):
    """Pallas TPU forward pass.

    Q: [B, H, S, Dk], K: [B, H, S, Dk], V: [B, H, S, Dv] -> context [B, H, S, Dv]
    matmul_dtype: dtype of the MXU operands (accumulation is always f32).
    """
    B, H, S, Dk = Q.shape
    Dv = V.shape[-1]
    BH = B * H

    q = Q.reshape(BH, S, Dk)
    k = K.reshape(BH, S, Dk)
    v = V.reshape(BH, S, Dv)

    tq = _pick_q_tile(S)
    G = _pick_head_group(BH, S, tq, Dk, Dv, budget_bytes=_TILE_VMEM_BUDGET)
    est = _estimate_vmem_bytes(G, tq, S, Dk, Dv)

    n_hg = BH // G
    n_qt = S // tq

    kernel = functools.partial(
        _sdpa_kernel,
        matmul_dtype=matmul_dtype,
        approx_recip=(matmul_dtype != jnp.float32),
    )

    out = pl.pallas_call(
        kernel,
        out_shape=jax.ShapeDtypeStruct((BH, S, Dv), Q.dtype),
        grid_spec=pltpu.PrefetchScalarGridSpec(
            num_scalar_prefetch=0,
            # q-tile axis innermost: K/V block index is unchanged across q tiles,
            # so the pipeline does not re-DMA K/V.
            grid=(n_hg, n_qt),
            in_specs=[
                pl.BlockSpec((G, tq, Dk), lambda i, j: (i, j, 0)),
                pl.BlockSpec((G, S, Dk), lambda i, j: (i, 0, 0)),
                pl.BlockSpec((G, S, Dv), lambda i, j: (i, 0, 0)),
            ],
            out_specs=pl.BlockSpec((G, tq, Dv), lambda i, j: (i, j, 0)),
        ),
        compiler_params=pltpu.CompilerParams(
            dimension_semantics=("parallel", "parallel"),
            vmem_limit_bytes=_vmem_limit_bytes(est),
        ),
    )(q, k, v)

    return out.reshape(B, H, S, Dv)


def _reference(Q, K, V):
    scores = jnp.matmul(Q, jnp.swapaxes(K, -1, -2)) / math.sqrt(D_K_SCALE)
    attn = jax.nn.softmax(scores, axis=-1)
    return jnp.matmul(attn, V)


if __name__ == "__main__":
    # Small shapes consistent with the module's attention semantics
    # (d_k = d_v = 64): batch=2, heads=4, seq=128.
    B, H, S, Dk, Dv = 2, 4, 128, 64, 64

    key = jax.random.PRNGKey(0)
    kq, kk, kv = jax.random.split(key, 3)
    Q = jax.random.normal(kq, (B, H, S, Dk), dtype=jnp.float32)
    K = jax.random.normal(kk, (B, H, S, Dk), dtype=jnp.float32)
    V = jax.random.normal(kv, (B, H, S, Dv), dtype=jnp.float32)

    ref = _reference(Q, K, V)

    # Exact path (f32 MXU operands) — tight tolerance against the reference.
    out_exact = jax.block_until_ready(
        scaled_dot_product_attention(Q, K, V, matmul_dtype=jnp.float32)
    )
    assert out_exact.shape == (B, H, S, Dv)
    assert jnp.allclose(out_exact, ref, atol=1e-4, rtol=1e-4), "f32 path mismatch"

    # Default fast path (bf16 MXU operands, f32 accumulation) — bf16 tolerance.
    out = jax.block_until_ready(scaled_dot_product_attention(Q, K, V))
    assert out.shape == (B, H, S, Dv)
    assert jnp.allclose(out, ref, atol=3e-2, rtol=3e-2), "bf16 path mismatch"

    print("KERNEL_OK")
</pallas_src>

<mosaic_0001>
module attributes {stable_mosaic.version = 11 : i64} {
  func.func @_sdpa_kernel(%arg0: i32, %arg1: i32, %arg2: memref<2x128x64xf32, #tpu.memory_space<vmem>>, %arg3: memref<2x128x64xf32, #tpu.memory_space<vmem>>, %arg4: memref<2x128x64xf32, #tpu.memory_space<vmem>>, %arg5: memref<2x128x64xf32, #tpu.memory_space<vmem>>) attributes {dimension_semantics = [#tpu.dimension_semantics<parallel>, #tpu.dimension_semantics<parallel>], iteration_bounds = array<i64: 4, 1>, scalar_prefetch = 0 : i64, scratch_operands = 0 : i64, tpu.core_type = #tpu.core_type<tc>, window_params = [{transform_indices = @transform_0, window_bounds = array<i64: 2, 128, 64>}, {transform_indices = @transform_1, window_bounds = array<i64: 2, 128, 64>}, {transform_indices = @transform_2, window_bounds = array<i64: 2, 128, 64>}, {transform_indices = @transform_3, window_bounds = array<i64: 2, 128, 64>}]} {
    %c0 = arith.constant 0 : index
    %c0_0 = arith.constant 0 : index
    %c0_1 = arith.constant 0 : index
    %0 = vector.load %arg2[%c0, %c0_0, %c0_1] : memref<2x128x64xf32, #tpu.memory_space<vmem>>, vector<2x128x64xf32>
    %cst = arith.constant 1.250000e-01 : f32
    %1 = vector.broadcast %cst : f32 to vector<2x128x64xf32>
    %2 = arith.mulf %0, %1 : vector<2x128x64xf32>
    %c0_2 = arith.constant 0 : index
    %c0_3 = arith.constant 0 : index
    %c0_4 = arith.constant 0 : index
    %3 = vector.load %arg3[%c0_2, %c0_3, %c0_4] : memref<2x128x64xf32, #tpu.memory_space<vmem>>, vector<2x128x64xf32>
    "tpu.trace_start"() <{level = 10 : i32, message = "gqd,gkd->gqk"}> : () -> ()
    %cst_5 = arith.constant dense<0.000000e+00> : vector<2x128x128xf32>
    %4 = tpu.matmul %2, %3, %cst_5 {dimension_numbers = #tpu.dot_dimension_numbers<[2], [2], [1], [1], [0, 0, 0, 1, 1, 1], [0], [0]>} : vector<2x128x64xf32>, vector<2x128x64xf32>, vector<2x128x128xf32> -> vector<2x128x128xf32>
    "tpu.trace_stop"() : () -> ()
    %cst_6 = arith.constant dense<0xFF800000> : vector<2x128xf32>
    %5 = vector.multi_reduction <maximumf>, %4, %cst_6 [2] : vector<2x128x128xf32> to vector<2x128xf32>
    %6 = vector.shape_cast %5 : vector<2x128xf32> to vector<2x128x1xf32>
    %7 = vector.broadcast %6 : vector<2x128x1xf32> to vector<2x128x128xf32>
    %8 = arith.subf %4, %7 : vector<2x128x128xf32>
    %9 = math.exp %8 : vector<2x128x128xf32>
    %cst_7 = arith.constant dense<0.000000e+00> : vector<2x128xf32>
    %10 = vector.multi_reduction <add>, %9, %cst_7 [2] : vector<2x128x128xf32> to vector<2x128xf32>
    %11 = vector.shape_cast %10 : vector<2x128xf32> to vector<2x128x1xf32>
    %c0_8 = arith.constant 0 : index
    %c0_9 = arith.constant 0 : index
    %c0_10 = arith.constant 0 : index
    %12 = vector.load %arg4[%c0_8, %c0_9, %c0_10] : memref<2x128x64xf32, #tpu.memory_space<vmem>>, vector<2x128x64xf32>
    "tpu.trace_start"() <{level = 10 : i32, message = "gqk,gkd->gqd"}> : () -> ()
    %cst_11 = arith.constant dense<0.000000e+00> : vector<2x128x64xf32>
    %13 = tpu.matmul %9, %12, %cst_11 {dimension_numbers = #tpu.dot_dimension_numbers<[2], [1], [1], [2], [0, 0, 0, 1, 1, 2], [0], [0]>} : vector<2x128x128xf32>, vector<2x128x64xf32>, vector<2x128x64xf32> -> vector<2x128x64xf32>
    "tpu.trace_stop"() : () -> ()
    %14 = tpu.reciprocal %11 : vector<2x128x1xf32> -> vector<2x128x1xf32>
    %15 = vector.broadcast %14 : vector<2x128x1xf32> to vector<2x128x64xf32>
    %16 = arith.mulf %13, %15 : vector<2x128x64xf32>
    %c0_12 = arith.constant 0 : index
    %c0_13 = arith.constant 0 : index
    %c0_14 = arith.constant 0 : index
    %17 = vector.load %arg5[%c0_12, %c0_13, %c0_14] : memref<2x128x64xf32, #tpu.memory_space<vmem>>, vector<2x128x64xf32>
    tpu.vector_store %arg5[%c0_12, %c0_13, %c0_14], %16 {strides = array<i32>} : memref<2x128x64xf32, #tpu.memory_space<vmem>>, vector<2x128x64xf32>,
    return
  }
  func.func @transform_0(%arg0: i32, %arg1: i32) -> (i32, i32, i32) {
    %c0_i32 = arith.constant 0 : i32
    %c0_i32_0 = arith.constant 0 : i32
    return %arg0, %arg1, %c0_i32 : i32, i32, i32
  }
  func.func @transform_1(%arg0: i32, %arg1: i32) -> (i32, i32, i32) {
    %c0_i32 = arith.constant 0 : i32
    %c0_i32_0 = arith.constant 0 : i32
    %c0_i32_1 = arith.constant 0 : i32
    return %arg0, %c0_i32, %c0_i32_0 : i32, i32, i32
  }
  func.func @transform_2(%arg0: i32, %arg1: i32) -> (i32, i32, i32) {
    %c0_i32 = arith.constant 0 : i32
    %c0_i32_0 = arith.constant 0 : i32
    %c0_i32_1 = arith.constant 0 : i32
    return %arg0, %c0_i32, %c0_i32_0 : i32, i32, i32
  }
  func.func @transform_3(%arg0: i32, %arg1: i32) -> (i32, i32, i32) {
    %c0_i32 = arith.constant 0 : i32
    %c0_i32_0 = arith.constant 0 : i32
    return %arg0, %arg1, %c0_i32 : i32, i32, i32
  }
}

</mosaic_0001>

<llo_original>
// kernel: tpu_custom_call.1
$region0: #{tpu_custom_call.1}
  #allocation0 [shape = 'u32[]', space=smem, size = 0x4, offset = 0x4, fixed_abs, tag = 'smem constant byte address 0x4 - core index']
  #allocation1 [shape = 'u32[144,128]{1,0:T(1,128)}', space=vmem, size = 0x12000, scoped, tag = 'internal scratch']
  %s0 = inlined_call_operand.vmem [shape: f32[8,128,64], index: 0, kind: input, shape index: {}]
  %s1 = inlined_call_operand.vmem [shape: f32[8,128,64], index: 1, kind: input, shape index: {}]
  %s2 = inlined_call_operand.vmem [shape: f32[8,128,64], index: 2, kind: input, shape index: {}]
  %s3 = inlined_call_operand.vmem [shape: f32[8,128,64], index: 3, kind: output, shape index: {}]
  %s4 = sld [smem:[#allocation0]]
  $region45: #{tpu_custom_call.1} parent=0
    _
  %s6 = ssub.s32 1, %s4
  %s7 = scalar_select 0, %s6, %s4
  loop: start=0, step=1, limit=6
  $region2: #{tpu_custom_call.1} parent=0 // loop_pre_header
    _
  $region3: #{tpu_custom_call.1} parent=0 // loop_header
    %s9 = sphi 0, %s13
    %p10 = scmp.ge.s32.totalorder %s9, 6
    %s16 = sphi 0, %s28
    %s17 = sphi 0, %s24
    %s18 = sphi 0, %s16
    %s19 = sphi 0, %s17
    %s20 = sphi 0, %s18
    %s21 = sphi 0, %s19
    %s33 = sphi 0, %s35
    %s36 = sphi 0, %s33
    %s37 = sphi 0, %s36
    %s53 = sphi 0, %s37
    %s59 = sphi 0, %s61
    %s62 = sphi 0, %s59
    %s63 = sphi 0, %s62
    %s79 = sphi 0, %s63
    %s85 = sphi 0, %s87
    %s88 = sphi 0, %s85
    %s89 = sphi 0, %s88
    %s105 = sphi 0, %s89
    %s113 = sphi 0, %s115
    %s116 = sphi 0, %s113
    %s117 = sphi 0, %s116
    %s133 = sphi 0, %s117
  $region4: #{tpu_custom_call.1} parent=0 // loop_header_branch
    %12 = sbr.rel (%p10) target = $region8
  $region5: #{tpu_custom_call.1} parent=0 // loop_body
    %s14 = ssub.s32 %s9, 1
    %s15 = ssub.s32 %s9, 2
    %s22 = sadd.s32 1, %s17
    %p23 = scmp.ge.s32.totalorder %s22, 1
    %s24 = scalar_select %p23, 0, %s22
    %s25 = sadd.s32 1, %s16
    %s26 = scalar_select %p23, %s25, %s16
    %p27 = scmp.ge.s32.totalorder %s26, 4
    %s28 = scalar_select %p27, 0, %s26
    %s29 = ssub.s32 %s16, %s28
    %s30 = ssub.s32 %s17, %s24
    %s31 = sor.u32 %s29, %s30
    %p32 = scmp.eq.s32.totalorder %s31, 0
    %s34 = sadd.s32 %s33, 1
    %s35 = scalar_select %p32, %s33, %s34
    %p38 = pneg %p32
    %p39 = scmp.eq.s32.totalorder %s9, 3
    %p40 = por %p38, %p39
    %p41 = scmp.ne.s32.totalorder %s33, %s36
    %p42 = scmp.eq.s32.totalorder %s9, 0
    %p43 = por %p41, %p42
    %p44 = scmp.ne.s32.totalorder %s33, %s36
    %p45 = scmp.eq.s32.totalorder %s14, 3
    %p46 = por %p44, %p45
    %p47 = scmp.ne.s32.totalorder %s36, %s37
    %p48 = scmp.eq.s32.totalorder %s14, 0
    %p49 = por %p47, %p48
    %p50 = scmp.ne.s32.totalorder %s36, %s37
    %p51 = scmp.eq.s32.totalorder %s15, 3
    %p52 = por %p50, %p51
    %p54 = scmp.ne.s32.totalorder %s37, %s53
    %p55 = scmp.eq.s32.totalorder %s15, 0
    %p56 = por %p54, %p55
    %s57 = ssub.s32 %s16, %s28
    %p58 = scmp.eq.s32.totalorder %s57, 0
    %s60 = sadd.s32 %s59, 1
    %s61 = scalar_select %p58, %s59, %s60
    %p64 = pneg %p58
    %p65 = scmp.eq.s32.totalorder %s9, 3
    %p66 = por %p64, %p65
    %p67 = scmp.ne.s32.totalorder %s59, %s62
    %p68 = scmp.eq.s32.totalorder %s9, 0
    %p69 = por %p67, %p68
    %p70 = scmp.ne.s32.totalorder %s59, %s62
    %p71 = scmp.eq.s32.totalorder %s14, 3
    %p72 = por %p70, %p71
    %p73 = scmp.ne.s32.totalorder %s62, %s63
    %p74 = scmp.eq.s32.totalorder %s14, 0
    %p75 = por %p73, %p74
    %p76 = scmp.ne.s32.totalorder %s62, %s63
    %p77 = scmp.eq.s32.totalorder %s15, 3
    %p78 = por %p76, %p77
    %p80 = scmp.ne.s32.totalorder %s63, %s79
    %p81 = scmp.eq.s32.totalorder %s15, 0
    %p82 = por %p80, %p81
    %s83 = ssub.s32 %s16, %s28
    %p84 = scmp.eq.s32.totalorder %s83, 0
    %s86 = sadd.s32 %s85, 1
    %s87 = scalar_select %p84, %s85, %s86
    %p90 = pneg %p84
    %p91 = scmp.eq.s32.totalorder %s9, 3
    %p92 = por %p90, %p91
    %p93 = scmp.ne.s32.totalorder %s85, %s88
    %p94 = scmp.eq.s32.totalorder %s9, 0
    %p95 = por %p93, %p94
    %p96 = scmp.ne.s32.totalorder %s85, %s88
    %p97 = scmp.eq.s32.totalorder %s14, 3
    %p98 = por %p96, %p97
    %p99 = scmp.ne.s32.totalorder %s88, %s89
    %p100 = scmp.eq.s32.totalorder %s14, 0
    %p101 = por %p99, %p100
    %p102 = scmp.ne.s32.totalorder %s88, %s89
    %p103 = scmp.eq.s32.totalorder %s15, 3
    %p104 = por %p102, %p103
    %p106 = scmp.ne.s32.totalorder %s89, %s105
    %p107 = scmp.eq.s32.totalorder %s15, 0
    %p108 = por %p106, %p107
    %s109 = ssub.s32 %s16, %s28
    %s110 = ssub.s32 %s17, %s24
    %s111 = sor.u32 %s109, %s110
    %p112 = scmp.eq.s32.totalorder %s111, 0
    %s114 = sadd.s32 %s113, 1
    %s115 = scalar_select %p112, %s113, %s114
    %p118 = pneg %p112
    %p119 = scmp.eq.s32.totalorder %s9, 3
    %p120 = por %p118, %p119
    %p121 = scmp.ne.s32.totalorder %s113, %s116
    %p122 = scmp.eq.s32.totalorder %s9, 0
    %p123 = por %p121, %p122
    %p124 = scmp.ne.s32.totalorder %s113, %s116
    %p125 = scmp.eq.s32.totalorder %s14, 3
    %p126 = por %p124, %p125
    %p127 = scmp.ne.s32.totalorder %s116, %s117
    %p128 = scmp.eq.s32.totalorder %s14, 0
    %p129 = por %p127, %p128
    %p130 = scmp.ne.s32.totalorder %s116, %s117
    %p131 = scmp.eq.s32.totalorder %s15, 3
    %p132 = por %p130, %p131
    %p134 = scmp.ne.s32.totalorder %s117, %s133
    %p135 = scmp.eq.s32.totalorder %s15, 0
    %p136 = por %p134, %p135
    %p137 = scmp.le.s32.totalorder 1, %s9
    %p138 = scmp.lt.s32.totalorder %s9, 5
    %p139 = pnand %p137, %p138
    %p140 = pneg %p139
    // Predicated region
    $region9: #{tpu_custom_call.1} parent=5 // pred_check
      _
    $region10: #{tpu_custom_call.1} parent=5 // pred_check_branch
      %142 = sbr.rel (%p139) target = $region12
    $region11: #{tpu_custom_call.1} parent=5 // pred_region
      %s143 = ssub.s32 %s9, 1
    $region12: #{tpu_custom_call.1} parent=5 // pred_fallthru
      _
    %p144 = scmp.lt.s32.totalorder %s9, 4
    // Predicated region
    $region13: #{tpu_custom_call.1} parent=5 // pred_check
      %p145 = pneg %p144
    $region14: #{tpu_custom_call.1} parent=5 // pred_check_branch
      %147 = sbr.rel (%p145) target = $region16
    $region15: #{tpu_custom_call.1} parent=5 // pred_region
      // Predicated region
      $region17: #{tpu_custom_call.1} parent=15 // pred_check
        %p148 = pneg %p43
      $region18: #{tpu_custom_call.1} parent=15 // pred_check_branch
        %150 = sbr.rel (%p148) target = $region20
      $region19: #{tpu_custom_call.1} parent=15 // pred_region
        %s151 = smul.u32 2, %s16
        %s152 = smul.u32 16, %s17
        %p153 = scmp.lt.s32.totalorder %s151, 7
        %s154 = scalar_select %p153, %s151, 7
        %p155 = scmp.lt.s32.totalorder %s152, 15
        %s156 = scalar_select %p155, %s152, 15
        %s157 = smul.addr %s154, 16
        %s158 = sadd.s32 %s156, %s157
        %s159 = smul.addr %s158, 8
        %s160 = scalar_lea.vmem %s0, %s159
        %s161 = smul.u32 2, %s16
        %s162 = smul.u32 16, %s17
      $region20: #{tpu_custom_call.1} parent=15 // pred_fallthru
        _
      // Predicated region
      $region21: #{tpu_custom_call.1} parent=15 // pred_check
        %p163 = pneg %p69
      $region22: #{tpu_custom_call.1} parent=15 // pred_check_branch
        %165 = sbr.rel (%p163) target = $region24
      $region23: #{tpu_custom_call.1} parent=15 // pred_region
        %s166 = smul.u32 2, %s16
        %p167 = scmp.lt.s32.totalorder %s166, 7
        %s168 = scalar_select %p167, %s166, 7
        %s169 = smul.addr %s168, 16
        %s170 = smul.addr %s169, 8
        %s171 = scalar_lea.vmem %s1, %s170
        %s172 = smul.u32 2, %s16
      $region24: #{tpu_custom_call.1} parent=15 // pred_fallthru
        _
      // Predicated region
      $region25: #{tpu_custom_call.1} parent=15 // pred_check
        %p173 = pneg %p95
      $region26: #{tpu_custom_call.1} parent=15 // pred_check_branch
        %175 = sbr.rel (%p173) target = $region28
      $region27: #{tpu_custom_call.1} parent=15 // pred_region
        %s176 = smul.u32 2, %s16
        %p177 = scmp.lt.s32.totalorder %s176, 7
        %s178 = scalar_select %p177, %s176, 7
        %s179 = smul.addr %s178, 16
        %s180 = smul.addr %s179, 8
        %s181 = scalar_lea.vmem %s2, %s180
        %s182 = smul.u32 2, %s16
      $region28: #{tpu_custom_call.1} parent=15 // pred_fallthru
        _
    $region16: #{tpu_custom_call.1} parent=5 // pred_fallthru
      _
    %p183 = scmp.le.s32.totalorder 1, %s9
    %p184 = scmp.lt.s32.totalorder %s9, 5
    %p185 = pnand %p183, %p184
    %p186 = pneg %p185
    // Predicated region
    $region29: #{tpu_custom_call.1} parent=5 // pred_check
      _
    $region30: #{tpu_custom_call.1} parent=5 // pred_check_branch
      %188 = sbr.rel (%p185) target = $region32
    $region31: #{tpu_custom_call.1} parent=5 // pred_region
      %s189 = ssub.s32 %s9, 1
      %s190 = smul.u32 2, %s18
      %s191 = smul.u32 16, %s19
      %p192 = scmp.lt.s32.totalorder %s190, 7
      %s193 = scalar_select %p192, %s190, 7
      %p194 = scmp.lt.s32.totalorder %s191, 15
      %s195 = scalar_select %p194, %s191, 15
      %s196 = smul.addr %s193, 16
      %s197 = sadd.s32 %s195, %s196
      %s198 = smul.addr %s197, 8
      %s199 = scalar_lea.vmem %s0, %s198
      %p200 = pneg %p49
      %p201 = pneg %p46
      %s202 = smul.u32 2, %s18
      %p203 = scmp.lt.s32.totalorder %s202, 7
      %s204 = scalar_select %p203, %s202, 7
      %s205 = smul.addr %s204, 16
      %s206 = smul.addr %s205, 8
      %s207 = scalar_lea.vmem %s1, %s206
      %p208 = pneg %p75
      %p209 = pneg %p72
      %s210 = smul.u32 2, %s18
      %p211 = scmp.lt.s32.totalorder %s210, 7
      %s212 = scalar_select %p211, %s210, 7
      %s213 = smul.addr %s212, 16
      %s214 = smul.addr %s213, 8
      %s215 = scalar_lea.vmem %s2, %s214
      %p216 = pneg %p101
      %p217 = pneg %p98
      %p218 = pneg %p129
      %p219 = pneg %p126
      %s220 = smul.u32 2, %s18
      %s221 = smul.u32 16, %s19
      %p222 = scmp.lt.s32.totalorder %s220, 7
      %s223 = scalar_select %p222, %s220, 7
      %p224 = scmp.lt.s32.totalorder %s221, 15
      %s225 = scalar_select %p224, %s221, 15
      %s226 = smul.addr %s223, 16
      %s227 = sadd.s32 %s225, %s226
      %s228 = smul.addr %s227, 8
      %s229 = scalar_lea.vmem %s3, %s228
      %s230 = smul.u32 2, %s18
      %s231 = smul.u32 16, %s19
      %p232 = scmp.lt.s32.totalorder %s230, 7
      %s233 = scalar_select %p232, %s230, 7
      %p234 = scmp.lt.s32.totalorder %s231, 15
      %s235 = scalar_select %p234, %s231, 15
      %s236 = smul.addr %s233, 16
      %s237 = sadd.s32 %s235, %s236
      %s238 = smul.addr %s237, 8
      %s239 = scalar_lea.vmem %s0, %s238
      %s240 = smul.u32 2, %s18
      %s241 = smul.u32 16, %s19
      %s242 = smul.u32 2, %s18
      %p243 = scmp.lt.s32.totalorder %s242, 7
      %s244 = scalar_select %p243, %s242, 7
      %s245 = smul.addr %s244, 16
      %s246 = smul.addr %s245, 8
      %s247 = scalar_lea.vmem %s1, %s246
      %s248 = smul.u32 2, %s18
      %s249 = smul.u32 2, %s18
      %p250 = scmp.lt.s32.totalorder %s249, 7
      %s251 = scalar_select %p250, %s249, 7
      %s252 = smul.addr %s251, 16
      %s253 = smul.addr %s252, 8
      %s254 = scalar_lea.vmem %s2, %s253
      %s255 = smul.u32 2, %s18
      %s256 = smul.u32 2, %s18
      %s257 = smul.u32 16, %s19
      %p258 = scmp.lt.s32.totalorder %s256, 7
      %s259 = scalar_select %p258, %s256, 7
      %p260 = scmp.lt.s32.totalorder %s257, 15
      %s261 = scalar_select %p260, %s257, 15
      %s262 = smul.addr %s259, 16
      %s263 = sadd.s32 %s261, %s262
      %s264 = smul.addr %s263, 8
      %s265 = scalar_lea.vmem %s3, %s264
      %s266 = smul.u32 2, %s18
      %s267 = smul.u32 16, %s19
      %v268 = vld [vmem:[%s239] sm:$0xff]
      %v269 = vld [vmem:[%s239 + $0x8] sm:$0xff]
      %v270 = vld [vmem:[%s239 + $0x10] sm:$0xff]
      %v271 = vld [vmem:[%s239 + $0x18] sm:$0xff]
      %v272 = vld [vmem:[%s239 + $0x20] sm:$0xff]
      %v273 = vld [vmem:[%s239 + $0x28] sm:$0xff]
      %v274 = vld [vmem:[%s239 + $0x30] sm:$0xff]
      %v275 = vld [vmem:[%s239 + $0x38] sm:$0xff]
      %v276 = vld [vmem:[%s239 + $0x40] sm:$0xff]
      %v277 = vld [vmem:[%s239 + $0x48] sm:$0xff]
      %v278 = vld [vmem:[%s239 + $0x50] sm:$0xff]
      %v279 = vld [vmem:[%s239 + $0x58] sm:$0xff]
      %v280 = vld [vmem:[%s239 + $0x60] sm:$0xff]
      %v281 = vld [vmem:[%s239 + $0x68] sm:$0xff]
      %v282 = vld [vmem:[%s239 + $0x70] sm:$0xff]
      %v283 = vld [vmem:[%s239 + $0x78] sm:$0xff]
      %v284 = vld [vmem:[%s239 + $0x80] sm:$0xff]
      %v285 = vld [vmem:[%s239 + $0x88] sm:$0xff]
      %v286 = vld [vmem:[%s239 + $0x90] sm:$0xff]
      %v287 = vld [vmem:[%s239 + $0x98] sm:$0xff]
      %v288 = vld [vmem:[%s239 + $0xa0] sm:$0xff]
      %v289 = vld [vmem:[%s239 + $0xa8] sm:$0xff]
      %v290 = vld [vmem:[%s239 + $0xb0] sm:$0xff]
      %v291 = vld [vmem:[%s239 + $0xb8] sm:$0xff]
      %v292 = vld [vmem:[%s239 + $0xc0] sm:$0xff]
      %v293 = vld [vmem:[%s239 + $0xc8] sm:$0xff]
      %v294 = vld [vmem:[%s239 + $0xd0] sm:$0xff]
      %v295 = vld [vmem:[%s239 + $0xd8] sm:$0xff]
      %v296 = vld [vmem:[%s239 + $0xe0] sm:$0xff]
      %v297 = vld [vmem:[%s239 + $0xe8] sm:$0xff]
      %v298 = vld [vmem:[%s239 + $0xf0] sm:$0xff]
      %v299 = vld [vmem:[%s239 + $0xf8] sm:$0xff]
      %v300 = vmul.f32 %v268, 0.125
      %v301 = vmul.f32 %v269, 0.125
      %v302 = vmul.f32 %v270, 0.125
      %v303 = vmul.f32 %v271, 0.125
      %v304 = vmul.f32 %v272, 0.125
      %v305 = vmul.f32 %v273, 0.125
      %v306 = vmul.f32 %v274, 0.125
      %v307 = vmul.f32 %v275, 0.125
      %v308 = vmul.f32 %v276, 0.125
      %v309 = vmul.f32 %v277, 0.125
      %v310 = vmul.f32 %v278, 0.125
      %v311 = vmul.f32 %v279, 0.125
      %v312 = vmul.f32 %v280, 0.125
      %v313 = vmul.f32 %v281, 0.125
      %v314 = vmul.f32 %v282, 0.125
      %v315 = vmul.f32 %v283, 0.125
      %v316 = vmul.f32 %v284, 0.125
      %v317 = vmul.f32 %v285, 0.125
      %v318 = vmul.f32 %v286, 0.125
      %v319 = vmul.f32 %v287, 0.125
      %v320 = vmul.f32 %v288, 0.125
      %v321 = vmul.f32 %v289, 0.125
      %v322 = vmul.f32 %v290, 0.125
      %v323 = vmul.f32 %v291, 0.125
      %v324 = vmul.f32 %v292, 0.125
      %v325 = vmul.f32 %v293, 0.125
      %v326 = vmul.f32 %v294, 0.125
      %v327 = vmul.f32 %v295, 0.125
      %v328 = vmul.f32 %v296, 0.125
      %v329 = vmul.f32 %v297, 0.125
      %v330 = vmul.f32 %v298, 0.125
      %v331 = vmul.f32 %v299, 0.125
      %v332 = vld [vmem:[%s247] sm:$0xff]
      %v333 = vld [vmem:[%s247 + $0x8] sm:$0xff]
      %v334 = vld [vmem:[%s247 + $0x10] sm:$0xff]
      %v335 = vld [vmem:[%s247 + $0x18] sm:$0xff]
      %v336 = vld [vmem:[%s247 + $0x20] sm:$0xff]
      %v337 = vld [vmem:[%s247 + $0x28] sm:$0xff]
      %v338 = vld [vmem:[%s247 + $0x30] sm:$0xff]
      %v339 = vld [vmem:[%s247 + $0x38] sm:$0xff]
      %v340 = vld [vmem:[%s247 + $0x40] sm:$0xff]
      %v341 = vld [vmem:[%s247 + $0x48] sm:$0xff]
      %v342 = vld [vmem:[%s247 + $0x50] sm:$0xff]
      %v343 = vld [vmem:[%s247 + $0x58] sm:$0xff]
      %v344 = vld [vmem:[%s247 + $0x60] sm:$0xff]
      %v345 = vld [vmem:[%s247 + $0x68] sm:$0xff]
      %v346 = vld [vmem:[%s247 + $0x70] sm:$0xff]
      %v347 = vld [vmem:[%s247 + $0x78] sm:$0xff]
      %v348 = vld [vmem:[%s247 + $0x80] sm:$0xff]
      %v349 = vld [vmem:[%s247 + $0x88] sm:$0xff]
      %v350 = vld [vmem:[%s247 + $0x90] sm:$0xff]
      %v351 = vld [vmem:[%s247 + $0x98] sm:$0xff]
      %v352 = vld [vmem:[%s247 + $0xa0] sm:$0xff]
      %v353 = vld [vmem:[%s247 + $0xa8] sm:$0xff]
      %v354 = vld [vmem:[%s247 + $0xb0] sm:$0xff]
      %v355 = vld [vmem:[%s247 + $0xb8] sm:$0xff]
      %v356 = vld [vmem:[%s247 + $0xc0] sm:$0xff]
      %v357 = vld [vmem:[%s247 + $0xc8] sm:$0xff]
      %v358 = vld [vmem:[%s247 + $0xd0] sm:$0xff]
      %v359 = vld [vmem:[%s247 + $0xd8] sm:$0xff]
      %v360 = vld [vmem:[%s247 + $0xe0] sm:$0xff]
      %v361 = vld [vmem:[%s247 + $0xe8] sm:$0xff]
      %v362 = vld [vmem:[%s247 + $0xf0] sm:$0xff]
      %v363 = vld [vmem:[%s247 + $0xf8] sm:$0xff]
      %vm364 = vcmask 523264
      %v366 = vsel %vm364, %v300, 0
      %v369 = vsel %vm364, %v301, 0
      %v372 = vsel %vm364, %v302, 0
      %v375 = vsel %vm364, %v303, 0
      %v378 = vsel %vm364, %v304, 0
      %v381 = vsel %vm364, %v305, 0
      %v384 = vsel %vm364, %v306, 0
      %v387 = vsel %vm364, %v307, 0
      %v390 = vsel %vm364, %v308, 0
      %v393 = vsel %vm364, %v309, 0
      %v396 = vsel %vm364, %v310, 0
      %v399 = vsel %vm364, %v311, 0
      %v402 = vsel %vm364, %v312, 0
      %v405 = vsel %vm364, %v313, 0
      %v408 = vsel %vm364, %v314, 0
      %v411 = vsel %vm364, %v315, 0
      %v414 = vsel %vm364, %v332, 0
      %v417 = vsel %vm364, %v333, 0
      %v420 = vsel %vm364, %v334, 0
      %v423 = vsel %vm364, %v335, 0
      %v426 = vsel %vm364, %v336, 0
      %v429 = vsel %vm364, %v337, 0
      %v432 = vsel %vm364, %v338, 0
      %v435 = vsel %vm364, %v339, 0
      %v438 = vsel %vm364, %v340, 0
      %v441 = vsel %vm364, %v341, 0
      %v444 = vsel %vm364, %v342, 0
      %v447 = vsel %vm364, %v343, 0
      %v450 = vsel %vm364, %v344, 0
      %v453 = vsel %vm364, %v345, 0
      %v456 = vsel %vm364, %v346, 0
      %v459 = vsel %vm364, %v347, 0
      %461 = vmatprep.subr.mxu0 0.0
      %462 = vmatpush1.xpose.msra.mxu0 %v414
      %463 = vmatprep.subr.mxu0 0.0
      %464 = vmatpush1.xpose.msra.mxu0 %v417
      %465 = vmatprep.subr.mxu0 0.0
      %466 = vmatpush1.xpose.msra.mxu0 %v420
      %467 = vmatprep.subr.mxu0 0.0
      %468 = vmatpush1.xpose.msra.mxu0 %v423
      %469 = vmatprep.subr.mxu0 0.0
      %470 = vmatpush1.xpose.msra.mxu0 %v426
      %471 = vmatprep.subr.mxu0 0.0
      %472 = vmatpush1.xpose.msra.mxu0 %v429
      %473 = vmatprep.subr.mxu0 0.0
      %474 = vmatpush1.xpose.msra.mxu0 %v432
      %475 = vmatprep.subr.mxu0 0.0
      %476 = vmatpush1.xpose.msra.mxu0 %v435
      %477 = vmatprep.subr.mxu0 0.0
      %478 = vmatpush1.xpose.msra.mxu0 %v438
      %479 = vmatprep.subr.mxu0 0.0
      %480 = vmatpush1.xpose.msra.mxu0 %v441
      %481 = vmatprep.subr.mxu0 0.0
      %482 = vmatpush1.xpose.msra.mxu0 %v444
      %483 = vmatprep.subr.mxu0 0.0
      %484 = vmatpush1.xpose.msra.mxu0 %v447
      %485 = vmatprep.subr.mxu0 0.0
      %486 = vmatpush1.xpose.msra.mxu0 %v450
      %487 = vmatprep.subr.mxu0 0.0
      %488 = vmatpush1.xpose.msra.mxu0 %v453
      %489 = vmatprep.subr.mxu0 0.0
      %490 = vmatpush1.xpose.msra.mxu0 %v456
      %491 = vmatprep.subr.mxu0 0.0
      %492 = vmatpush1.xpose.msra.mxu0 %v459
      %493 = vmatprep.subr.mxu0 0.0
      %494 = vmatpush1.xpose.msra.mxu0 0.0
      %495 = vmatprep.subr.mxu0 0.0
      %496 = vmatpush1.xpose.msra.mxu0 0.0
      %497 = vmatprep.subr.mxu0 0.0
      %498 = vmatpush1.xpose.msra.mxu0 0.0
      %499 = vmatprep.subr.mxu0 0.0
      %500 = vmatpush1.xpose.msra.mxu0 0.0
      %501 = vmatprep.subr.mxu0 0.0
      %502 = vmatpush1.xpose.msra.mxu0 0.0
      %503 = vmatprep.subr.mxu0 0.0
      %504 = vmatpush1.xpose.msra.mxu0 0.0
      %505 = vmatprep.subr.mxu0 0.0
      %506 = vmatpush1.xpose.msra.mxu0 0.0
      %507 = vmatprep.subr.mxu0 0.0
      %508 = vmatpush1.xpose.msra.mxu0 0.0
      %509 = vmatprep.subr.mxu0 0.0
      %510 = vmatpush1.xpose.msra.mxu0 0.0
      %511 = vmatprep.subr.mxu0 0.0
      %512 = vmatpush1.xpose.msra.mxu0 0.0
      %513 = vmatprep.subr.mxu0 0.0
      %514 = vmatpush1.xpose.msra.mxu0 0.0
      %515 = vmatprep.subr.mxu0 0.0
      %516 = vmatpush1.xpose.msra.mxu0 0.0
      %517 = vmatprep.subr.mxu0 0.0
      %518 = vmatpush1.xpose.msra.mxu0 0.0
      %519 = vmatprep.subr.mxu0 0.0
      %520 = vmatpush1.xpose.msra.mxu0 0.0
      %521 = vmatprep.subr.mxu0 0.0
      %522 = vmatpush1.xpose.msra.mxu0 0.0
      %523 = vmatprep.subr.mxu0 0.0
      %524 = vmatpush1.xpose.msra.mxu0 0.0
      %525 = vmatprep.mubr.f32.mxu0 0.0
      %526 = vmatmul.mubr.f32.gmra.mrb[0].mxu0 %v366
      %v527 = vpop.f32.mrb[0].mxu0
      %v528 = vadd.f32 0.0, %v527
      %v529 = vpop.f32.mrb[0].mxu0
      %530 = vmatprep.mubr.f32.mxu0 0.0
      %531 = vmatmul.mubr.f32.gmra.mrb[0].mxu0 %v369
      %v532 = vpop.f32.mrb[0].mxu0
      %v533 = vadd.f32 0.0, %v532
      %v534 = vpop.f32.mrb[0].mxu0
      %535 = vmatprep.mubr.f32.mxu0 0.0
      %536 = vmatmul.mubr.f32.gmra.mrb[0].mxu0 %v372
      %v537 = vpop.f32.mrb[0].mxu0
      %v538 = vadd.f32 0.0, %v537
      %v539 = vpop.f32.mrb[0].mxu0
      %540 = vmatprep.mubr.f32.mxu0 0.0
      %541 = vmatmul.mubr.f32.gmra.mrb[0].mxu0 %v375
      %v542 = vpop.f32.mrb[0].mxu0
      %v543 = vadd.f32 0.0, %v542
      %v544 = vpop.f32.mrb[0].mxu0
      %545 = vmatprep.mubr.f32.mxu0 0.0
      %546 = vmatmul.mubr.f32.gmra.mrb[0].mxu0 %v378
      %v547 = vpop.f32.mrb[0].mxu0
      %v548 = vadd.f32 0.0, %v547
      %v549 = vpop.f32.mrb[0].mxu0
      %550 = vmatprep.mubr.f32.mxu0 0.0
      %551 = vmatmul.mubr.f32.gmra.mrb[0].mxu0 %v381
      %v552 = vpop.f32.mrb[0].mxu0
      %v553 = vadd.f32 0.0, %v552
      %v554 = vpop.f32.mrb[0].mxu0
      %555 = vmatprep.mubr.f32.mxu0 0.0
      %556 = vmatmul.mubr.f32.gmra.mrb[0].mxu0 %v384
      %v557 = vpop.f32.mrb[0].mxu0
      %v558 = vadd.f32 0.0, %v557
      %v559 = vpop.f32.mrb[0].mxu0
      %560 = vmatprep.mubr.f32.mxu0 0.0
      %561 = vmatmul.mubr.f32.gmra.mrb[0].mxu0 %v387
      %v562 = vpop.f32.mrb[0].mxu0
      %v563 = vadd.f32 0.0, %v562
      %v564 = vpop.f32.mrb[0].mxu0
      %565 = vmatprep.mubr.f32.mxu0 0.0
      %566 = vmatmul.mubr.f32.gmra.mrb[0].mxu0 %v390
      %v567 = vpop.f32.mrb[0].mxu0
      %v568 = vadd.f32 0.0, %v567
      %v569 = vpop.f32.mrb[0].mxu0
      %570 = vmatprep.mubr.f32.mxu0 0.0
      %571 = vmatmul.mubr.f32.gmra.mrb[0].mxu0 %v393
      %v572 = vpop.f32.mrb[0].mxu0
      %v573 = vadd.f32 0.0, %v572
      %v574 = vpop.f32.mrb[0].mxu0
      %575 = vmatprep.mubr.f32.mxu0 0.0
      %576 = vmatmul.mubr.f32.gmra.mrb[0].mxu0 %v396
      %v577 = vpop.f32.mrb[0].mxu0
      %v578 = vadd.f32 0.0, %v577
      %v579 = vpop.f32.mrb[0].mxu0
      %580 = vmatprep.mubr.f32.mxu0 0.0
      %581 = vmatmul.mubr.f32.gmra.mrb[0].mxu0 %v399
      %v582 = vpop.f32.mrb[0].mxu0
      %v583 = vadd.f32 0.0, %v582
      %v584 = vpop.f32.mrb[0].mxu0
      %585 = vmatprep.mubr.f32.mxu0 0.0
      %586 = vmatmul.mubr.f32.gmra.mrb[0].mxu0 %v402
      %v587 = vpop.f32.mrb[0].mxu0
      %v588 = vadd.f32 0.0, %v587
      %v589 = vpop.f32.mrb[0].mxu0
      %590 = vmatprep.mubr.f32.mxu0 0.0
      %591 = vmatmul.mubr.f32.gmra.mrb[0].mxu0 %v405
      %v592 = vpop.f32.mrb[0].mxu0
      %v593 = vadd.f32 0.0, %v592
      %v594 = vpop.f32.mrb[0].mxu0
      %595 = vmatprep.mubr.f32.mxu0 0.0
      %596 = vmatmul.mubr.f32.gmra.mrb[0].mxu0 %v408
      %v597 = vpop.f32.mrb[0].mxu0
      %v598 = vadd.f32 0.0, %v597
      %v599 = vpop.f32.mrb[0].mxu0
      %600 = vmatprep.mubr.f32.mxu0 0.0
      %601 = vmatmul.mubr.f32.gmra.mrb[0].mxu0 %v411
      %v602 = vpop.f32.mrb[0].mxu0
      %v603 = vadd.f32 0.0, %v602
      %v604 = vpop.f32.mrb[0].mxu0
      %605 = vdwg.mxu0
      %v607 = vsel %vm364, %v316, 0
      %v610 = vsel %vm364, %v317, 0
      %v613 = vsel %vm364, %v318, 0
      %v616 = vsel %vm364, %v319, 0
      %v619 = vsel %vm364, %v320, 0
      %v622 = vsel %vm364, %v321, 0
      %v625 = vsel %vm364, %v322, 0
      %v628 = vsel %vm364, %v323, 0
      %v631 = vsel %vm364, %v324, 0
      %v634 = vsel %vm364, %v325, 0
      %v637 = vsel %vm364, %v326, 0
      %v640 = vsel %vm364, %v327, 0
      %v643 = vsel %vm364, %v328, 0
      %v646 = vsel %vm364, %v329, 0
      %v649 = vsel %vm364, %v330, 0
      %v652 = vsel %vm364, %v331, 0
      %v655 = vsel %vm364, %v348, 0
      %v658 = vsel %vm364, %v349, 0
      %v661 = vsel %vm364, %v350, 0
      %v664 = vsel %vm364, %v351, 0
      %v667 = vsel %vm364, %v352, 0
      %v670 = vsel %vm364, %v353, 0
      %v673 = vsel %vm364, %v354, 0
      %v676 = vsel %vm364, %v355, 0
      %v679 = vsel %vm364, %v356, 0
      %v682 = vsel %vm364, %v357, 0
      %v685 = vsel %vm364, %v358, 0
      %v688 = vsel %vm364, %v359, 0
      %v691 = vsel %vm364, %v360, 0
      %v694 = vsel %vm364, %v361, 0
      %v697 = vsel %vm364, %v362, 0
      %v700 = vsel %vm364, %v363, 0
      %702 = vmatprep.subr.mxu0 0.0
      %703 = vmatpush1.xpose.msra.mxu0 %v655
      %704 = vmatprep.subr.mxu0 0.0
      %705 = vmatpush1.xpose.msra.mxu0 %v658
      %706 = vmatprep.subr.mxu0 0.0
      %707 = vmatpush1.xpose.msra.mxu0 %v661
      %708 = vmatprep.subr.mxu0 0.0
      %709 = vmatpush1.xpose.msra.mxu0 %v664
      %710 = vmatprep.subr.mxu0 0.0
      %711 = vmatpush1.xpose.msra.mxu0 %v667
      %712 = vmatprep.subr.mxu0 0.0
      %713 = vmatpush1.xpose.msra.mxu0 %v670
      %714 = vmatprep.subr.mxu0 0.0
      %715 = vmatpush1.xpose.msra.mxu0 %v673
      %716 = vmatprep.subr.mxu0 0.0
      %717 = vmatpush1.xpose.msra.mxu0 %v676
      %718 = vmatprep.subr.mxu0 0.0
      %719 = vmatpush1.xpose.msra.mxu0 %v679
      %720 = vmatprep.subr.mxu0 0.0
      %721 = vmatpush1.xpose.msra.mxu0 %v682
      %722 = vmatprep.subr.mxu0 0.0
      %723 = vmatpush1.xpose.msra.mxu0 %v685
      %724 = vmatprep.subr.mxu0 0.0
      %725 = vmatpush1.xpose.msra.mxu0 %v688
      %726 = vmatprep.subr.mxu0 0.0
      %727 = vmatpush1.xpose.msra.mxu0 %v691
      %728 = vmatprep.subr.mxu0 0.0
      %729 = vmatpush1.xpose.msra.mxu0 %v694
      %730 = vmatprep.subr.mxu0 0.0
      %731 = vmatpush1.xpose.msra.mxu0 %v697
      %732 = vmatprep.subr.mxu0 0.0
      %733 = vmatpush1.xpose.msra.mxu0 %v700
      %734 = vmatprep.subr.mxu0 0.0
      %735 = vmatpush1.xpose.msra.mxu0 0.0
      %736 = vmatprep.subr.mxu0 0.0
      %737 = vmatpush1.xpose.msra.mxu0 0.0
      %738 = vmatprep.subr.mxu0 0.0
      %739 = vmatpush1.xpose.msra.mxu0 0.0
      %740 = vmatprep.subr.mxu0 0.0
      %741 = vmatpush1.xpose.msra.mxu0 0.0
      %742 = vmatprep.subr.mxu0 0.0
      %743 = vmatpush1.xpose.msra.mxu0 0.0
      %744 = vmatprep.subr.mxu0 0.0
      %745 = vmatpush1.xpose.msra.mxu0 0.0
      %746 = vmatprep.subr.mxu0 0.0
      %747 = vmatpush1.xpose.msra.mxu0 0.0
      %748 = vmatprep.subr.mxu0 0.0
      %749 = vmatpush1.xpose.msra.mxu0 0.0
      %750 = vmatprep.subr.mxu0 0.0
      %751 = vmatpush1.xpose.msra.mxu0 0.0
      %752 = vmatprep.subr.mxu0 0.0
      %753 = vmatpush1.xpose.msra.mxu0 0.0
      %754 = vmatprep.subr.mxu0 0.0
      %755 = vmatpush1.xpose.msra.mxu0 0.0
      %756 = vmatprep.subr.mxu0 0.0
      %757 = vmatpush1.xpose.msra.mxu0 0.0
      %758 = vmatprep.subr.mxu0 0.0
      %759 = vmatpush1.xpose.msra.mxu0 0.0
      %760 = vmatprep.subr.mxu0 0.0
      %761 = vmatpush1.xpose.msra.mxu0 0.0
      %762 = vmatprep.subr.mxu0 0.0
      %763 = vmatpush1.xpose.msra.mxu0 0.0
      %764 = vmatprep.subr.mxu0 0.0
      %765 = vmatpush1.xpose.msra.mxu0 0.0
      %766 = vmatprep.mubr.f32.mxu0 0.0
      %767 = vmatmul.mubr.f32.gmra.mrb[0].mxu0 %v607
      %v768 = vpop.f32.mrb[0].mxu0
      %v769 = vadd.f32 0.0, %v768
      %v770 = vpop.f32.mrb[0].mxu0
      %771 = vmatprep.mubr.f32.mxu0 0.0
      %772 = vmatmul.mubr.f32.gmra.mrb[0].mxu0 %v610
      %v773 = vpop.f32.mrb[0].mxu0
      %v774 = vadd.f32 0.0, %v773
      %v775 = vpop.f32.mrb[0].mxu0
      %776 = vmatprep.mubr.f32.mxu0 0.0
      %777 = vmatmul.mubr.f32.gmra.mrb[0].mxu0 %v613
      %v778 = vpop.f32.mrb[0].mxu0
      %v779 = vadd.f32 0.0, %v778
      %v780 = vpop.f32.mrb[0].mxu0
      %781 = vmatprep.mubr.f32.mxu0 0.0
      %782 = vmatmul.mubr.f32.gmra.mrb[0].mxu0 %v616
      %v783 = vpop.f32.mrb[0].mxu0
      %v784 = vadd.f32 0.0, %v783
      %v785 = vpop.f32.mrb[0].mxu0
      %786 = vmatprep.mubr.f32.mxu0 0.0
      %787 = vmatmul.mubr.f32.gmra.mrb[0].mxu0 %v619
      %v788 = vpop.f32.mrb[0].mxu0
      %v789 = vadd.f32 0.0, %v788
      %v790 = vpop.f32.mrb[0].mxu0
      %791 = vmatprep.mubr.f32.mxu0 0.0
      %792 = vmatmul.mubr.f32.gmra.mrb[0].mxu0 %v622
      %v793 = vpop.f32.mrb[0].mxu0
      %v794 = vadd.f32 0.0, %v793
      %v795 = vpop.f32.mrb[0].mxu0
      %796 = vmatprep.mubr.f32.mxu0 0.0
      %797 = vmatmul.mubr.f32.gmra.mrb[0].mxu0 %v625
      %v798 = vpop.f32.mrb[0].mxu0
      %v799 = vadd.f32 0.0, %v798
      %v800 = vpop.f32.mrb[0].mxu0
      %801 = vmatprep.mubr.f32.mxu0 0.0
      %802 = vmatmul.mubr.f32.gmra.mrb[0].mxu0 %v628
      %v803 = vpop.f32.mrb[0].mxu0
      %v804 = vadd.f32 0.0, %v803
      %v805 = vpop.f32.mrb[0].mxu0
      %806 = vmatprep.mubr.f32.mxu0 0.0
      %807 = vmatmul.mubr.f32.gmra.mrb[0].mxu0 %v631
      %v808 = vpop.f32.mrb[0].mxu0
      %v809 = vadd.f32 0.0, %v808
      %v810 = vpop.f32.mrb[0].mxu0
      %811 = vmatprep.mubr.f32.mxu0 0.0
      %812 = vmatmul.mubr.f32.gmra.mrb[0].mxu0 %v634
      %v813 = vpop.f32.mrb[0].mxu0
      %v814 = vadd.f32 0.0, %v813
      %v815 = vpop.f32.mrb[0].mxu0
      %816 = vmatprep.mubr.f32.mxu0 0.0
      %817 = vmatmul.mubr.f32.gmra.mrb[0].mxu0 %v637
      %v818 = vpop.f32.mrb[0].mxu0
      %v819 = vadd.f32 0.0, %v818
      %v820 = vpop.f32.mrb[0].mxu0
      %821 = vmatprep.mubr.f32.mxu0 0.0
      %822 = vmatmul.mubr.f32.gmra.mrb[0].mxu0 %v640
      %v823 = vpop.f32.mrb[0].mxu0
      %v824 = vadd.f32 0.0, %v823
      %v825 = vpop.f32.mrb[0].mxu0
      %826 = vmatprep.mubr.f32.mxu0 0.0
      %827 = vmatmul.mubr.f32.gmra.mrb[0].mxu0 %v643
      %v828 = vpop.f32.mrb[0].mxu0
      %v829 = vadd.f32 0.0, %v828
      %v830 = vpop.f32.mrb[0].mxu0
      %831 = vmatprep.mubr.f32.mxu0 0.0
      %832 = vmatmul.mubr.f32.gmra.mrb[0].mxu0 %v646
      %v833 = vpop.f32.mrb[0].mxu0
      %v834 = vadd.f32 0.0, %v833
      %v835 = vpop.f32.mrb[0].mxu0
      %836 = vmatprep.mubr.f32.mxu0 0.0
      %837 = vmatmul.mubr.f32.gmra.mrb[0].mxu0 %v649
      %v838 = vpop.f32.mrb[0].mxu0
      %v839 = vadd.f32 0.0, %v838
      %v840 = vpop.f32.mrb[0].mxu0
      %841 = vmatprep.mubr.f32.mxu0 0.0
      %842 = vmatmul.mubr.f32.gmra.mrb[0].mxu0 %v652
      %v843 = vpop.f32.mrb[0].mxu0
      %v844 = vadd.f32 0.0, %v843
      %v845 = vpop.f32.mrb[0].mxu0
      %846 = vdwg.mxu0
      %847 = vmax.xlane.f32.xlu0 %v528
      %v848 = vpop.xlane.xlu0 %847
      %849 = vmax.xlane.f32.xlu0 %v533
      %v850 = vpop.xlane.xlu0 %849
      %851 = vmax.xlane.f32.xlu0 %v538
      %v852 = vpop.xlane.xlu0 %851
      %853 = vmax.xlane.f32.xlu0 %v543
      %v854 = vpop.xlane.xlu0 %853
      %855 = vmax.xlane.f32.xlu0 %v548
      %v856 = vpop.xlane.xlu0 %855
      %857 = vmax.xlane.f32.xlu0 %v553
      %v858 = vpop.xlane.xlu0 %857
      %859 = vmax.xlane.f32.xlu0 %v558
      %v860 = vpop.xlane.xlu0 %859
      %861 = vmax.xlane.f32.xlu0 %v563
      %v862 = vpop.xlane.xlu0 %861
      %863 = vmax.xlane.f32.xlu0 %v568
      %v864 = vpop.xlane.xlu0 %863
      %865 = vmax.xlane.f32.xlu0 %v573
      %v866 = vpop.xlane.xlu0 %865
      %867 = vmax.xlane.f32.xlu0 %v578
      %v868 = vpop.xlane.xlu0 %867
      %869 = vmax.xlane.f32.xlu0 %v583
      %v870 = vpop.xlane.xlu0 %869
      %871 = vmax.xlane.f32.xlu0 %v588
      %v872 = vpop.xlane.xlu0 %871
      %873 = vmax.xlane.f32.xlu0 %v593
      %v874 = vpop.xlane.xlu0 %873
      %875 = vmax.xlane.f32.xlu0 %v598
      %v876 = vpop.xlane.xlu0 %875
      %877 = vmax.xlane.f32.xlu0 %v603
      %v878 = vpop.xlane.xlu0 %877
      %879 = vmax.xlane.f32.xlu0 %v769
      %v880 = vpop.xlane.xlu0 %879
      %881 = vmax.xlane.f32.xlu0 %v774
      %v882 = vpop.xlane.xlu0 %881
      %883 = vmax.xlane.f32.xlu0 %v779
      %v884 = vpop.xlane.xlu0 %883
      %885 = vmax.xlane.f32.xlu0 %v784
      %v886 = vpop.xlane.xlu0 %885
      %887 = vmax.xlane.f32.xlu0 %v789
      %v888 = vpop.xlane.xlu0 %887
      %889 = vmax.xlane.f32.xlu0 %v794
      %v890 = vpop.xlane.xlu0 %889
      %891 = vmax.xlane.f32.xlu0 %v799
      %v892 = vpop.xlane.xlu0 %891
      %893 = vmax.xlane.f32.xlu0 %v804
      %v894 = vpop.xlane.xlu0 %893
      %895 = vmax.xlane.f32.xlu0 %v809
      %v896 = vpop.xlane.xlu0 %895
      %897 = vmax.xlane.f32.xlu0 %v814
      %v898 = vpop.xlane.xlu0 %897
      %899 = vmax.xlane.f32.xlu0 %v819
      %v900 = vpop.xlane.xlu0 %899
      %901 = vmax.xlane.f32.xlu0 %v824
      %v902 = vpop.xlane.xlu0 %901
      %903 = vmax.xlane.f32.xlu0 %v829
      %v904 = vpop.xlane.xlu0 %903
      %905 = vmax.xlane.f32.xlu0 %v834
      %v906 = vpop.xlane.xlu0 %905
      %907 = vmax.xlane.f32.xlu0 %v839
      %v908 = vpop.xlane.xlu0 %907
      %909 = vmax.xlane.f32.xlu0 %v844
      %v910 = vpop.xlane.xlu0 %909
      %v911 = vsub.f32 %v528, %v848
      %v912 = vsub.f32 %v533, %v850
      %v913 = vsub.f32 %v538, %v852
      %v914 = vsub.f32 %v543, %v854
      %v915 = vsub.f32 %v548, %v856
      %v916 = vsub.f32 %v553, %v858
      %v917 = vsub.f32 %v558, %v860
      %v918 = vsub.f32 %v563, %v862
      %v919 = vsub.f32 %v568, %v864
      %v920 = vsub.f32 %v573, %v866
      %v921 = vsub.f32 %v578, %v868
      %v922 = vsub.f32 %v583, %v870
      %v923 = vsub.f32 %v588, %v872
      %v924 = vsub.f32 %v593, %v874
      %v925 = vsub.f32 %v598, %v876
      %v926 = vsub.f32 %v603, %v878
      %v927 = vsub.f32 %v769, %v880
      %v928 = vsub.f32 %v774, %v882
      %v929 = vsub.f32 %v779, %v884
      %v930 = vsub.f32 %v784, %v886
      %v931 = vsub.f32 %v789, %v888
      %v932 = vsub.f32 %v794, %v890
      %v933 = vsub.f32 %v799, %v892
      %v934 = vsub.f32 %v804, %v894
      %v935 = vsub.f32 %v809, %v896
      %v936 = vsub.f32 %v814, %v898
      %v937 = vsub.f32 %v819, %v900
      %v938 = vsub.f32 %v824, %v902
      %v939 = vsub.f32 %v829, %v904
      %v940 = vsub.f32 %v834, %v906
      %v941 = vsub.f32 %v839, %v908
      %v942 = vsub.f32 %v844, %v910
      %v943 = vmul.f32 %v911, 1.442695
      %v944 = vpow.pop %v943
      %v945 = vmul.f32 %v912, 1.442695
      %v946 = vpow.pop %v945
      %v947 = vmul.f32 %v913, 1.442695
      %v948 = vpow.pop %v947
      %v949 = vmul.f32 %v914, 1.442695
      %v950 = vpow.pop %v949
      %v951 = vmul.f32 %v915, 1.442695
      %v952 = vpow.pop %v951
      %v953 = vmul.f32 %v916, 1.442695
      %v954 = vpow.pop %v953
      %v955 = vmul.f32 %v917, 1.442695
      %v956 = vpow.pop %v955
      %v957 = vmul.f32 %v918, 1.442695
      %v958 = vpow.pop %v957
      %v959 = vmul.f32 %v919, 1.442695
      %v960 = vpow.pop %v959
      %v961 = vmul.f32 %v920, 1.442695
      %v962 = vpow.pop %v961
      %v963 = vmul.f32 %v921, 1.442695
      %v964 = vpow.pop %v963
      %v965 = vmul.f32 %v922, 1.442695
      %v966 = vpow.pop %v965
      %v967 = vmul.f32 %v923, 1.442695
      %v968 = vpow.pop %v967
      %v969 = vmul.f32 %v924, 1.442695
      %v970 = vpow.pop %v969
      %v971 = vmul.f32 %v925, 1.442695
      %v972 = vpow.pop %v971
      %v973 = vmul.f32 %v926, 1.442695
      %v974 = vpow.pop %v973
      %v975 = vmul.f32 %v927, 1.442695
      %v976 = vpow.pop %v975
      %v977 = vmul.f32 %v928, 1.442695
      %v978 = vpow.pop %v977
      %v979 = vmul.f32 %v929, 1.442695
      %v980 = vpow.pop %v979
      %v981 = vmul.f32 %v930, 1.442695
      %v982 = vpow.pop %v981
      %v983 = vmul.f32 %v931, 1.442695
      %v984 = vpow.pop %v983
      %v985 = vmul.f32 %v932, 1.442695
      %v986 = vpow.pop %v985
      %v987 = vmul.f32 %v933, 1.442695
      %v988 = vpow.pop %v987
      %v989 = vmul.f32 %v934, 1.442695
      %v990 = vpow.pop %v989
      %v991 = vmul.f32 %v935, 1.442695
      %v992 = vpow.pop %v991
      %v993 = vmul.f32 %v936, 1.442695
      %v994 = vpow.pop %v993
      %v995 = vmul.f32 %v937, 1.442695
      %v996 = vpow.pop %v995
      %v997 = vmul.f32 %v938, 1.442695
      %v998 = vpow.pop %v997
      %v999 = vmul.f32 %v939, 1.442695
      %v1000 = vpow.pop %v999
      %v1001 = vmul.f32 %v940, 1.442695
      %v1002 = vpow.pop %v1001
      %v1003 = vmul.f32 %v941, 1.442695
      %v1004 = vpow.pop %v1003
      %v1005 = vmul.f32 %v942, 1.442695
      %v1006 = vpow.pop %v1005
      %1007 = vadd.xlane.f32.xlu0 %v944
      %v1008 = vpop.xlane.xlu0 %1007
      %1009 = vadd.xlane.f32.xlu0 %v946
      %v1010 = vpop.xlane.xlu0 %1009
      %1011 = vadd.xlane.f32.xlu0 %v948
      %v1012 = vpop.xlane.xlu0 %1011
      %1013 = vadd.xlane.f32.xlu0 %v950
      %v1014 = vpop.xlane.xlu0 %1013
      %1015 = vadd.xlane.f32.xlu0 %v952
      %v1016 = vpop.xlane.xlu0 %1015
      %1017 = vadd.xlane.f32.xlu0 %v954
      %v1018 = vpop.xlane.xlu0 %1017
      %1019 = vadd.xlane.f32.xlu0 %v956
      %v1020 = vpop.xlane.xlu0 %1019
      %1021 = vadd.xlane.f32.xlu0 %v958
      %v1022 = vpop.xlane.xlu0 %1021
      %1023 = vadd.xlane.f32.xlu0 %v960
      %v1024 = vpop.xlane.xlu0 %1023
      %1025 = vadd.xlane.f32.xlu0 %v962
      %v1026 = vpop.xlane.xlu0 %1025
      %1027 = vadd.xlane.f32.xlu0 %v964
      %v1028 = vpop.xlane.xlu0 %1027
      %1029 = vadd.xlane.f32.xlu0 %v966
      %v1030 = vpop.xlane.xlu0 %1029
      %1031 = vadd.xlane.f32.xlu0 %v968
      %v1032 = vpop.xlane.xlu0 %1031
      %1033 = vadd.xlane.f32.xlu0 %v970
      %v1034 = vpop.xlane.xlu0 %1033
      %1035 = vadd.xlane.f32.xlu0 %v972
      %v1036 = vpop.xlane.xlu0 %1035
      %1037 = vadd.xlane.f32.xlu0 %v974
      %v1038 = vpop.xlane.xlu0 %1037
      %1039 = vadd.xlane.f32.xlu0 %v976
      %v1040 = vpop.xlane.xlu0 %1039
      %1041 = vadd.xlane.f32.xlu0 %v978
      %v1042 = vpop.xlane.xlu0 %1041
      %1043 = vadd.xlane.f32.xlu0 %v980
      %v1044 = vpop.xlane.xlu0 %1043
      %1045 = vadd.xlane.f32.xlu0 %v982
      %v1046 = vpop.xlane.xlu0 %1045
      %1047 = vadd.xlane.f32.xlu0 %v984
      %v1048 = vpop.xlane.xlu0 %1047
      %1049 = vadd.xlane.f32.xlu0 %v986
      %v1050 = vpop.xlane.xlu0 %1049
      %1051 = vadd.xlane.f32.xlu0 %v988
      %v1052 = vpop.xlane.xlu0 %1051
      %1053 = vadd.xlane.f32.xlu0 %v990
      %v1054 = vpop.xlane.xlu0 %1053
      %1055 = vadd.xlane.f32.xlu0 %v992
      %v1056 = vpop.xlane.xlu0 %1055
      %1057 = vadd.xlane.f32.xlu0 %v994
      %v1058 = vpop.xlane.xlu0 %1057
      %1059 = vadd.xlane.f32.xlu0 %v996
      %v1060 = vpop.xlane.xlu0 %1059
      %1061 = vadd.xlane.f32.xlu0 %v998
      %v1062 = vpop.xlane.xlu0 %1061
      %1063 = vadd.xlane.f32.xlu0 %v1000
      %v1064 = vpop.xlane.xlu0 %1063
      %1065 = vadd.xlane.f32.xlu0 %v1002
      %v1066 = vpop.xlane.xlu0 %1065
      %1067 = vadd.xlane.f32.xlu0 %v1004
      %v1068 = vpop.xlane.xlu0 %1067
      %1069 = vadd.xlane.f32.xlu0 %v1006
      %v1070 = vpop.xlane.xlu0 %1069
      %v1071 = vld [vmem:[%s254] sm:$0xff]
      %v1072 = vld [vmem:[%s254 + $0x8] sm:$0xff]
      %v1073 = vld [vmem:[%s254 + $0x10] sm:$0xff]
      %v1074 = vld [vmem:[%s254 + $0x18] sm:$0xff]
      %v1075 = vld [vmem:[%s254 + $0x20] sm:$0xff]
      %v1076 = vld [vmem:[%s254 + $0x28] sm:$0xff]
      %v1077 = vld [vmem:[%s254 + $0x30] sm:$0xff]
      %v1078 = vld [vmem:[%s254 + $0x38] sm:$0xff]
      %v1079 = vld [vmem:[%s254 + $0x40] sm:$0xff]
      %v1080 = vld [vmem:[%s254 + $0x48] sm:$0xff]
      %v1081 = vld [vmem:[%s254 + $0x50] sm:$0xff]
      %v1082 = vld [vmem:[%s254 + $0x58] sm:$0xff]
      %v1083 = vld [vmem:[%s254 + $0x60] sm:$0xff]
      %v1084 = vld [vmem:[%s254 + $0x68] sm:$0xff]
      %v1085 = vld [vmem:[%s254 + $0x70] sm:$0xff]
      %v1086 = vld [vmem:[%s254 + $0x78] sm:$0xff]
      %v1087 = vld [vmem:[%s254 + $0x80] sm:$0xff]
      %v1088 = vld [vmem:[%s254 + $0x88] sm:$0xff]
      %v1089 = vld [vmem:[%s254 + $0x90] sm:$0xff]
      %v1090 = vld [vmem:[%s254 + $0x98] sm:$0xff]
      %v1091 = vld [vmem:[%s254 + $0xa0] sm:$0xff]
      %v1092 = vld [vmem:[%s254 + $0xa8] sm:$0xff]
      %v1093 = vld [vmem:[%s254 + $0xb0] sm:$0xff]
      %v1094 = vld [vmem:[%s254 + $0xb8] sm:$0xff]
      %v1095 = vld [vmem:[%s254 + $0xc0] sm:$0xff]
      %v1096 = vld [vmem:[%s254 + $0xc8] sm:$0xff]
      %v1097 = vld [vmem:[%s254 + $0xd0] sm:$0xff]
      %v1098 = vld [vmem:[%s254 + $0xd8] sm:$0xff]
      %v1099 = vld [vmem:[%s254 + $0xe0] sm:$0xff]
      %v1100 = vld [vmem:[%s254 + $0xe8] sm:$0xff]
      %v1101 = vld [vmem:[%s254 + $0xf0] sm:$0xff]
      %v1102 = vld [vmem:[%s254 + $0xf8] sm:$0xff]
      %1103 = vmatprep.subr.mxu0 0.0
      %1104 = vmatpush1.msra.mxu0 %v1071
      %1105 = vmatprep.subr.mxu0 0.0
      %1106 = vmatpush1.msra.mxu0 %v1072
      %1107 = vmatprep.subr.mxu0 0.0
      %1108 = vmatpush1.msra.mxu0 %v1073
      %1109 = vmatprep.subr.mxu0 0.0
      %1110 = vmatpush1.msra.mxu0 %v1074
      %1111 = vmatprep.subr.mxu0 0.0
      %1112 = vmatpush1.msra.mxu0 %v1075
      %1113 = vmatprep.subr.mxu0 0.0
      %1114 = vmatpush1.msra.mxu0 %v1076
      %1115 = vmatprep.subr.mxu0 0.0
      %1116 = vmatpush1.msra.mxu0 %v1077
      %1117 = vmatprep.subr.mxu0 0.0
      %1118 = vmatpush1.msra.mxu0 %v1078
      %1119 = vmatprep.subr.mxu0 0.0
      %1120 = vmatpush1.msra.mxu0 %v1079
      %1121 = vmatprep.subr.mxu0 0.0
      %1122 = vmatpush1.msra.mxu0 %v1080
      %1123 = vmatprep.subr.mxu0 0.0
      %1124 = vmatpush1.msra.mxu0 %v1081
      %1125 = vmatprep.subr.mxu0 0.0
      %1126 = vmatpush1.msra.mxu0 %v1082
      %1127 = vmatprep.subr.mxu0 0.0
      %1128 = vmatpush1.msra.mxu0 %v1083
      %1129 = vmatprep.subr.mxu0 0.0
      %1130 = vmatpush1.msra.mxu0 %v1084
      %1131 = vmatprep.subr.mxu0 0.0
      %1132 = vmatpush1.msra.mxu0 %v1085
      %1133 = vmatprep.subr.mxu0 0.0
      %1134 = vmatpush1.msra.mxu0 %v1086
      %1135 = vmatprep.subr.mxu0 0.0
      %1136 = vmatpush1.msra.mxu0 0.0
      %1137 = vmatprep.subr.mxu0 0.0
      %1138 = vmatpush1.msra.mxu0 0.0
      %1139 = vmatprep.subr.mxu0 0.0
      %1140 = vmatpush1.msra.mxu0 0.0
      %1141 = vmatprep.subr.mxu0 0.0
      %1142 = vmatpush1.msra.mxu0 0.0
      %1143 = vmatprep.subr.mxu0 0.0
      %1144 = vmatpush1.msra.mxu0 0.0
      %1145 = vmatprep.subr.mxu0 0.0
      %1146 = vmatpush1.msra.mxu0 0.0
      %1147 = vmatprep.subr.mxu0 0.0
      %1148 = vmatpush1.msra.mxu0 0.0
      %1149 = vmatprep.subr.mxu0 0.0
      %1150 = vmatpush1.msra.mxu0 0.0
      %1151 = vmatprep.subr.mxu0 0.0
      %1152 = vmatpush1.msra.mxu0 0.0
      %1153 = vmatprep.subr.mxu0 0.0
      %1154 = vmatpush1.msra.mxu0 0.0
      %1155 = vmatprep.subr.mxu0 0.0
      %1156 = vmatpush1.msra.mxu0 0.0
      %1157 = vmatprep.subr.mxu0 0.0
      %1158 = vmatpush1.msra.mxu0 0.0
      %1159 = vmatprep.subr.mxu0 0.0
      %1160 = vmatpush1.msra.mxu0 0.0
      %1161 = vmatprep.subr.mxu0 0.0
      %1162 = vmatpush1.msra.mxu0 0.0
      %1163 = vmatprep.subr.mxu0 0.0
      %1164 = vmatpush1.msra.mxu0 0.0
      %1165 = vmatprep.subr.mxu0 0.0
      %1166 = vmatpush1.msra.mxu0 0.0
      %1167 = vmatprep.mubr.f32.mxu0 0.0
      %1168 = vmatmul.mubr.f32.gmra.mrb[0].mxu0 %v944
      %v1169 = vpop.f32.mrb[0].mxu0
      %v1170 = vadd.f32 0.0, %v1169
      %v1171 = vpop.f32.mrb[0].mxu0
      %1172 = vmatprep.mubr.f32.mxu0 0.0
      %1173 = vmatmul.mubr.f32.gmra.mrb[0].mxu0 %v946
      %v1174 = vpop.f32.mrb[0].mxu0
      %v1175 = vadd.f32 0.0, %v1174
      %v1176 = vpop.f32.mrb[0].mxu0
      %1177 = vmatprep.mubr.f32.mxu0 0.0
      %1178 = vmatmul.mubr.f32.gmra.mrb[0].mxu0 %v948
      %v1179 = vpop.f32.mrb[0].mxu0
      %v1180 = vadd.f32 0.0, %v1179
      %v1181 = vpop.f32.mrb[0].mxu0
      %1182 = vmatprep.mubr.f32.mxu0 0.0
      %1183 = vmatmul.mubr.f32.gmra.mrb[0].mxu0 %v950
      %v1184 = vpop.f32.mrb[0].mxu0
      %v1185 = vadd.f32 0.0, %v1184
      %v1186 = vpop.f32.mrb[0].mxu0
      %1187 = vmatprep.mubr.f32.mxu0 0.0
      %1188 = vmatmul.mubr.f32.gmra.mrb[0].mxu0 %v952
      %v1189 = vpop.f32.mrb[0].mxu0
      %v1190 = vadd.f32 0.0, %v1189
      %v1191 = vpop.f32.mrb[0].mxu0
      %1192 = vmatprep.mubr.f32.mxu0 0.0
      %1193 = vmatmul.mubr.f32.gmra.mrb[0].mxu0 %v954
      %v1194 = vpop.f32.mrb[0].mxu0
      %v1195 = vadd.f32 0.0, %v1194
      %v1196 = vpop.f32.mrb[0].mxu0
      %1197 = vmatprep.mubr.f32.mxu0 0.0
      %1198 = vmatmul.mubr.f32.gmra.mrb[0].mxu0 %v956
      %v1199 = vpop.f32.mrb[0].mxu0
      %v1200 = vadd.f32 0.0, %v1199
      %v1201 = vpop.f32.mrb[0].mxu0
      %1202 = vmatprep.mubr.f32.mxu0 0.0
      %1203 = vmatmul.mubr.f32.gmra.mrb[0].mxu0 %v958
      %v1204 = vpop.f32.mrb[0].mxu0
      %v1205 = vadd.f32 0.0, %v1204
      %v1206 = vpop.f32.mrb[0].mxu0
      %1207 = vmatprep.mubr.f32.mxu0 0.0
      %1208 = vmatmul.mubr.f32.gmra.mrb[0].mxu0 %v960
      %v1209 = vpop.f32.mrb[0].mxu0
      %v1210 = vadd.f32 0.0, %v1209
      %v1211 = vpop.f32.mrb[0].mxu0
      %1212 = vmatprep.mubr.f32.mxu0 0.0
      %1213 = vmatmul.mubr.f32.gmra.mrb[0].mxu0 %v962
      %v1214 = vpop.f32.mrb[0].mxu0
      %v1215 = vadd.f32 0.0, %v1214
      %v1216 = vpop.f32.mrb[0].mxu0
      %1217 = vmatprep.mubr.f32.mxu0 0.0
      %1218 = vmatmul.mubr.f32.gmra.mrb[0].mxu0 %v964
      %v1219 = vpop.f32.mrb[0].mxu0
      %v1220 = vadd.f32 0.0, %v1219
      %v1221 = vpop.f32.mrb[0].mxu0
      %1222 = vmatprep.mubr.f32.mxu0 0.0
      %1223 = vmatmul.mubr.f32.gmra.mrb[0].mxu0 %v966
      %v1224 = vpop.f32.mrb[0].mxu0
      %v1225 = vadd.f32 0.0, %v1224
      %v1226 = vpop.f32.mrb[0].mxu0
      %1227 = vmatprep.mubr.f32.mxu0 0.0
      %1228 = vmatmul.mubr.f32.gmra.mrb[0].mxu0 %v968
      %v1229 = vpop.f32.mrb[0].mxu0
      %v1230 = vadd.f32 0.0, %v1229
      %v1231 = vpop.f32.mrb[0].mxu0
      %1232 = vmatprep.mubr.f32.mxu0 0.0
      %1233 = vmatmul.mubr.f32.gmra.mrb[0].mxu0 %v970
      %v1234 = vpop.f32.mrb[0].mxu0
      %v1235 = vadd.f32 0.0, %v1234
      %v1236 = vpop.f32.mrb[0].mxu0
      %1237 = vmatprep.mubr.f32.mxu0 0.0
      %1238 = vmatmul.mubr.f32.gmra.mrb[0].mxu0 %v972
      %v1239 = vpop.f32.mrb[0].mxu0
      %v1240 = vadd.f32 0.0, %v1239
      %v1241 = vpop.f32.mrb[0].mxu0
      %1242 = vmatprep.mubr.f32.mxu0 0.0
      %1243 = vmatmul.mubr.f32.gmra.mrb[0].mxu0 %v974
      %v1244 = vpop.f32.mrb[0].mxu0
      %v1245 = vadd.f32 0.0, %v1244
      %v1246 = vpop.f32.mrb[0].mxu0
      %1247 = vdwg.mxu0
      %1248 = vmatprep.subr.mxu0 0.0
      %1249 = vmatpush1.msra.mxu0 %v1087
      %1250 = vmatprep.subr.mxu0 0.0
      %1251 = vmatpush1.msra.mxu0 %v1088
      %1252 = vmatprep.subr.mxu0 0.0
      %1253 = vmatpush1.msra.mxu0 %v1089
      %1254 = vmatprep.subr.mxu0 0.0
      %1255 = vmatpush1.msra.mxu0 %v1090
      %1256 = vmatprep.subr.mxu0 0.0
      %1257 = vmatpush1.msra.mxu0 %v1091
      %1258 = vmatprep.subr.mxu0 0.0
      %1259 = vmatpush1.msra.mxu0 %v1092
      %1260 = vmatprep.subr.mxu0 0.0
      %1261 = vmatpush1.msra.mxu0 %v1093
      %1262 = vmatprep.subr.mxu0 0.0
      %1263 = vmatpush1.msra.mxu0 %v1094
      %1264 = vmatprep.subr.mxu0 0.0
      %1265 = vmatpush1.msra.mxu0 %v1095
      %1266 = vmatprep.subr.mxu0 0.0
      %1267 = vmatpush1.msra.mxu0 %v1096
      %1268 = vmatprep.subr.mxu0 0.0
      %1269 = vmatpush1.msra.mxu0 %v1097
      %1270 = vmatprep.subr.mxu0 0.0
      %1271 = vmatpush1.msra.mxu0 %v1098
      %1272 = vmatprep.subr.mxu0 0.0
      %1273 = vmatpush1.msra.mxu0 %v1099
      %1274 = vmatprep.subr.mxu0 0.0
      %1275 = vmatpush1.msra.mxu0 %v1100
      %1276 = vmatprep.subr.mxu0 0.0
      %1277 = vmatpush1.msra.mxu0 %v1101
      %1278 = vmatprep.subr.mxu0 0.0
      %1279 = vmatpush1.msra.mxu0 %v1102
      %1280 = vmatprep.subr.mxu0 0.0
      %1281 = vmatpush1.msra.mxu0 0.0
      %1282 = vmatprep.subr.mxu0 0.0
      %1283 = vmatpush1.msra.mxu0 0.0
      %1284 = vmatprep.subr.mxu0 0.0
      %1285 = vmatpush1.msra.mxu0 0.0
      %1286 = vmatprep.subr.mxu0 0.0
      %1287 = vmatpush1.msra.mxu0 0.0
      %1288 = vmatprep.subr.mxu0 0.0
      %1289 = vmatpush1.msra.mxu0 0.0
      %1290 = vmatprep.subr.mxu0 0.0
      %1291 = vmatpush1.msra.mxu0 0.0
      %1292 = vmatprep.subr.mxu0 0.0
      %1293 = vmatpush1.msra.mxu0 0.0
      %1294 = vmatprep.subr.mxu0 0.0
      %1295 = vmatpush1.msra.mxu0 0.0
      %1296 = vmatprep.subr.mxu0 0.0
      %1297 = vmatpush1.msra.mxu0 0.0
      %1298 = vmatprep.subr.mxu0 0.0
      %1299 = vmatpush1.msra.mxu0 0.0
      %1300 = vmatprep.subr.mxu0 0.0
      %1301 = vmatpush1.msra.mxu0 0.0
      %1302 = vmatprep.subr.mxu0 0.0
      %1303 = vmatpush1.msra.mxu0 0.0
      %1304 = vmatprep.subr.mxu0 0.0
      %1305 = vmatpush1.msra.mxu0 0.0
      %1306 = vmatprep.subr.mxu0 0.0
      %1307 = vmatpush1.msra.mxu0 0.0
      %1308 = vmatprep.subr.mxu0 0.0
      %1309 = vmatpush1.msra.mxu0 0.0
      %1310 = vmatprep.subr.mxu0 0.0
      %1311 = vmatpush1.msra.mxu0 0.0
      %1312 = vmatprep.mubr.f32.mxu0 0.0
      %1313 = vmatmul.mubr.f32.gmra.mrb[0].mxu0 %v976
      %v1314 = vpop.f32.mrb[0].mxu0
      %v1315 = vadd.f32 0.0, %v1314
      %v1316 = vpop.f32.mrb[0].mxu0
      %1317 = vmatprep.mubr.f32.mxu0 0.0
      %1318 = vmatmul.mubr.f32.gmra.mrb[0].mxu0 %v978
      %v1319 = vpop.f32.mrb[0].mxu0
      %v1320 = vadd.f32 0.0, %v1319
      %v1321 = vpop.f32.mrb[0].mxu0
      %1322 = vmatprep.mubr.f32.mxu0 0.0
      %1323 = vmatmul.mubr.f32.gmra.mrb[0].mxu0 %v980
      %v1324 = vpop.f32.mrb[0].mxu0
      %v1325 = vadd.f32 0.0, %v1324
      %v1326 = vpop.f32.mrb[0].mxu0
      %1327 = vmatprep.mubr.f32.mxu0 0.0
      %1328 = vmatmul.mubr.f32.gmra.mrb[0].mxu0 %v982
      %v1329 = vpop.f32.mrb[0].mxu0
      %v1330 = vadd.f32 0.0, %v1329
      %v1331 = vpop.f32.mrb[0].mxu0
      %1332 = vmatprep.mubr.f32.mxu0 0.0
      %1333 = vmatmul.mubr.f32.gmra.mrb[0].mxu0 %v984
      %v1334 = vpop.f32.mrb[0].mxu0
      %v1335 = vadd.f32 0.0, %v1334
      %v1336 = vpop.f32.mrb[0].mxu0
      %1337 = vmatprep.mubr.f32.mxu0 0.0
      %1338 = vmatmul.mubr.f32.gmra.mrb[0].mxu0 %v986
      %v1339 = vpop.f32.mrb[0].mxu0
      %v1340 = vadd.f32 0.0, %v1339
      %v1341 = vpop.f32.mrb[0].mxu0
      %1342 = vmatprep.mubr.f32.mxu0 0.0
      %1343 = vmatmul.mubr.f32.gmra.mrb[0].mxu0 %v988
      %v1344 = vpop.f32.mrb[0].mxu0
      %v1345 = vadd.f32 0.0, %v1344
      %v1346 = vpop.f32.mrb[0].mxu0
      %1347 = vmatprep.mubr.f32.mxu0 0.0
      %1348 = vmatmul.mubr.f32.gmra.mrb[0].mxu0 %v990
      %v1349 = vpop.f32.mrb[0].mxu0
      %v1350 = vadd.f32 0.0, %v1349
      %v1351 = vpop.f32.mrb[0].mxu0
      %1352 = vmatprep.mubr.f32.mxu0 0.0
      %1353 = vmatmul.mubr.f32.gmra.mrb[0].mxu0 %v992
      %v1354 = vpop.f32.mrb[0].mxu0
      %v1355 = vadd.f32 0.0, %v1354
      %v1356 = vpop.f32.mrb[0].mxu0
      %1357 = vmatprep.mubr.f32.mxu0 0.0
      %1358 = vmatmul.mubr.f32.gmra.mrb[0].mxu0 %v994
      %v1359 = vpop.f32.mrb[0].mxu0
      %v1360 = vadd.f32 0.0, %v1359
      %v1361 = vpop.f32.mrb[0].mxu0
      %1362 = vmatprep.mubr.f32.mxu0 0.0
      %1363 = vmatmul.mubr.f32.gmra.mrb[0].mxu0 %v996
      %v1364 = vpop.f32.mrb[0].mxu0
      %v1365 = vadd.f32 0.0, %v1364
      %v1366 = vpop.f32.mrb[0].mxu0
      %1367 = vmatprep.mubr.f32.mxu0 0.0
      %1368 = vmatmul.mubr.f32.gmra.mrb[0].mxu0 %v998
      %v1369 = vpop.f32.mrb[0].mxu0
      %v1370 = vadd.f32 0.0, %v1369
      %v1371 = vpop.f32.mrb[0].mxu0
      %1372 = vmatprep.mubr.f32.mxu0 0.0
      %1373 = vmatmul.mubr.f32.gmra.mrb[0].mxu0 %v1000
      %v1374 = vpop.f32.mrb[0].mxu0
      %v1375 = vadd.f32 0.0, %v1374
      %v1376 = vpop.f32.mrb[0].mxu0
      %1377 = vmatprep.mubr.f32.mxu0 0.0
      %1378 = vmatmul.mubr.f32.gmra.mrb[0].mxu0 %v1002
      %v1379 = vpop.f32.mrb[0].mxu0
      %v1380 = vadd.f32 0.0, %v1379
      %v1381 = vpop.f32.mrb[0].mxu0
      %1382 = vmatprep.mubr.f32.mxu0 0.0
      %1383 = vmatmul.mubr.f32.gmra.mrb[0].mxu0 %v1004
      %v1384 = vpop.f32.mrb[0].mxu0
      %v1385 = vadd.f32 0.0, %v1384
      %v1386 = vpop.f32.mrb[0].mxu0
      %1387 = vmatprep.mubr.f32.mxu0 0.0
      %1388 = vmatmul.mubr.f32.gmra.mrb[0].mxu0 %v1006
      %v1389 = vpop.f32.mrb[0].mxu0
      %v1390 = vadd.f32 0.0, %v1389
      %v1391 = vpop.f32.mrb[0].mxu0
      %1392 = vdwg.mxu0
      %v1393 = vrcp.pop %v1008
      %v1394 = vrcp.pop %v1010
      %v1395 = vrcp.pop %v1012
      %v1396 = vrcp.pop %v1014
      %v1397 = vrcp.pop %v1016
      %v1398 = vrcp.pop %v1018
      %v1399 = vrcp.pop %v1020
      %v1400 = vrcp.pop %v1022
      %v1401 = vrcp.pop %v1024
      %v1402 = vrcp.pop %v1026
      %v1403 = vrcp.pop %v1028
      %v1404 = vrcp.pop %v1030
      %v1405 = vrcp.pop %v1032
      %v1406 = vrcp.pop %v1034
      %v1407 = vrcp.pop %v1036
      %v1408 = vrcp.pop %v1038
      %v1409 = vrcp.pop %v1040
      %v1410 = vrcp.pop %v1042
      %v1411 = vrcp.pop %v1044
      %v1412 = vrcp.pop %v1046
      %v1413 = vrcp.pop %v1048
      %v1414 = vrcp.pop %v1050
      %v1415 = vrcp.pop %v1052
      %v1416 = vrcp.pop %v1054
      %v1417 = vrcp.pop %v1056
      %v1418 = vrcp.pop %v1058
      %v1419 = vrcp.pop %v1060
      %v1420 = vrcp.pop %v1062
      %v1421 = vrcp.pop %v1064
      %v1422 = vrcp.pop %v1066
      %v1423 = vrcp.pop %v1068
      %v1424 = vrcp.pop %v1070
      %v1425 = vmul.f32 %v1170, %v1393
      %v1426 = vmul.f32 %v1175, %v1394
      %v1427 = vmul.f32 %v1180, %v1395
      %v1428 = vmul.f32 %v1185, %v1396
      %v1429 = vmul.f32 %v1190, %v1397
      %v1430 = vmul.f32 %v1195, %v1398
      %v1431 = vmul.f32 %v1200, %v1399
      %v1432 = vmul.f32 %v1205, %v1400
      %v1433 = vmul.f32 %v1210, %v1401
      %v1434 = vmul.f32 %v1215, %v1402
      %v1435 = vmul.f32 %v1220, %v1403
      %v1436 = vmul.f32 %v1225, %v1404
      %v1437 = vmul.f32 %v1230, %v1405
      %v1438 = vmul.f32 %v1235, %v1406
      %v1439 = vmul.f32 %v1240, %v1407
      %v1440 = vmul.f32 %v1245, %v1408
      %v1441 = vmul.f32 %v1315, %v1409
      %v1442 = vmul.f32 %v1320, %v1410
      %v1443 = vmul.f32 %v1325, %v1411
      %v1444 = vmul.f32 %v1330, %v1412
      %v1445 = vmul.f32 %v1335, %v1413
      %v1446 = vmul.f32 %v1340, %v1414
      %v1447 = vmul.f32 %v1345, %v1415
      %v1448 = vmul.f32 %v1350, %v1416
      %v1449 = vmul.f32 %v1355, %v1417
      %v1450 = vmul.f32 %v1360, %v1418
      %v1451 = vmul.f32 %v1365, %v1419
      %v1452 = vmul.f32 %v1370, %v1420
      %v1453 = vmul.f32 %v1375, %v1421
      %v1454 = vmul.f32 %v1380, %v1422
      %v1455 = vmul.f32 %v1385, %v1423
      %v1456 = vmul.f32 %v1390, %v1424
      %1457 = vst.msk [vmem:[%s265] sm:$0xff] %vm364, %v1425
      %1458 = vst.msk [vmem:[%s265 + $0x8] sm:$0xff] %vm364, %v1426
      %1459 = vst.msk [vmem:[%s265 + $0x10] sm:$0xff] %vm364, %v1427
      %1460 = vst.msk [vmem:[%s265 + $0x18] sm:$0xff] %vm364, %v1428
      %1461 = vst.msk [vmem:[%s265 + $0x20] sm:$0xff] %vm364, %v1429
      %1462 = vst.msk [vmem:[%s265 + $0x28] sm:$0xff] %vm364, %v1430
      %1463 = vst.msk [vmem:[%s265 + $0x30] sm:$0xff] %vm364, %v1431
      %1464 = vst.msk [vmem:[%s265 + $0x38] sm:$0xff] %vm364, %v1432
      %1465 = vst.msk [vmem:[%s265 + $0x40] sm:$0xff] %vm364, %v1433
      %1466 = vst.msk [vmem:[%s265 + $0x48] sm:$0xff] %vm364, %v1434
      %1467 = vst.msk [vmem:[%s265 + $0x50] sm:$0xff] %vm364, %v1435
      %1468 = vst.msk [vmem:[%s265 + $0x58] sm:$0xff] %vm364, %v1436
      %1469 = vst.msk [vmem:[%s265 + $0x60] sm:$0xff] %vm364, %v1437
      %1470 = vst.msk [vmem:[%s265 + $0x68] sm:$0xff] %vm364, %v1438
      %1471 = vst.msk [vmem:[%s265 + $0x70] sm:$0xff] %vm364, %v1439
      %1472 = vst.msk [vmem:[%s265 + $0x78] sm:$0xff] %vm364, %v1440
      %1473 = vst.msk [vmem:[%s265 + $0x80] sm:$0xff] %vm364, %v1441
      %1474 = vst.msk [vmem:[%s265 + $0x88] sm:$0xff] %vm364, %v1442
      %1475 = vst.msk [vmem:[%s265 + $0x90] sm:$0xff] %vm364, %v1443
      %1476 = vst.msk [vmem:[%s265 + $0x98] sm:$0xff] %vm364, %v1444
      %1477 = vst.msk [vmem:[%s265 + $0xa0] sm:$0xff] %vm364, %v1445
      %1478 = vst.msk [vmem:[%s265 + $0xa8] sm:$0xff] %vm364, %v1446
      %1479 = vst.msk [vmem:[%s265 + $0xb0] sm:$0xff] %vm364, %v1447
      %1480 = vst.msk [vmem:[%s265 + $0xb8] sm:$0xff] %vm364, %v1448
      %1481 = vst.msk [vmem:[%s265 + $0xc0] sm:$0xff] %vm364, %v1449
      %1482 = vst.msk [vmem:[%s265 + $0xc8] sm:$0xff] %vm364, %v1450
      %1483 = vst.msk [vmem:[%s265 + $0xd0] sm:$0xff] %vm364, %v1451
      %1484 = vst.msk [vmem:[%s265 + $0xd8] sm:$0xff] %vm364, %v1452
      %1485 = vst.msk [vmem:[%s265 + $0xe0] sm:$0xff] %vm364, %v1453
      %1486 = vst.msk [vmem:[%s265 + $0xe8] sm:$0xff] %vm364, %v1454
      %1487 = vst.msk [vmem:[%s265 + $0xf0] sm:$0xff] %vm364, %v1455
      %1488 = vst.msk [vmem:[%s265 + $0xf8] sm:$0xff] %vm364, %v1456
      %s1489 = smul.u32 2, %s18
      %s1490 = smul.u32 16, %s19
      %p1491 = scmp.lt.s32.totalorder %s1489, 7
      %s1492 = scalar_select %p1491, %s1489, 7
      %p1493 = scmp.lt.s32.totalorder %s1490, 15
      %s1494 = scalar_select %p1493, %s1490, 15
      %s1495 = smul.addr %s1492, 16
      %s1496 = sadd.s32 %s1494, %s1495
      %s1497 = smul.addr %s1496, 8
      %s1498 = scalar_lea.vmem %s3, %s1497
      // Predicated region
      $region33: #{tpu_custom_call.1} parent=31 // pred_check
        %p1499 = pneg %p126
      $region34: #{tpu_custom_call.1} parent=31 // pred_check_branch
        %1501 = sbr.rel (%p1499) target = $region36
      $region35: #{tpu_custom_call.1} parent=31 // pred_region
        %s1502 = smul.u32 2, %s18
        %s1503 = smul.u32 16, %s19
      $region36: #{tpu_custom_call.1} parent=31 // pred_fallthru
        _
    $region32: #{tpu_custom_call.1} parent=5 // pred_fallthru
      _
    %p1504 = scmp.le.s32.totalorder 2, %s9
    // Predicated region
    $region37: #{tpu_custom_call.1} parent=5 // pred_check
      %p1505 = pneg %p1504
    $region38: #{tpu_custom_call.1} parent=5 // pred_check_branch
      %1507 = sbr.rel (%p1505) target = $region40
    $region39: #{tpu_custom_call.1} parent=5 // pred_region
      %s1508 = ssub.s32 %s9, 2
      // Predicated region
      $region41: #{tpu_custom_call.1} parent=39 // pred_check
        %p1509 = pneg %p132
      $region42: #{tpu_custom_call.1} parent=39 // pred_check_branch
        %1511 = sbr.rel (%p1509) target = $region44
      $region43: #{tpu_custom_call.1} parent=39 // pred_region
        %s1512 = smul.u32 2, %s20
        %s1513 = smul.u32 16, %s21
        %p1514 = scmp.lt.s32.totalorder %s1512, 7
        %s1515 = scalar_select %p1514, %s1512, 7
        %p1516 = scmp.lt.s32.totalorder %s1513, 15
        %s1517 = scalar_select %p1516, %s1513, 15
        %s1518 = smul.addr %s1515, 16
        %s1519 = sadd.s32 %s1517, %s1518
        %s1520 = smul.addr %s1519, 8
        %s1521 = scalar_lea.vmem %s3, %s1520
      $region44: #{tpu_custom_call.1} parent=39 // pred_fallthru
        _
    $region40: #{tpu_custom_call.1} parent=5 // pred_fallthru
      _
  $region6: #{tpu_custom_call.1} parent=0 // loop_footer
    %s13 = sadd.s32 1, %s9
  $region7: #{tpu_custom_call.1} parent=0 // loop_footer_branch
    %8 = sbr.rel target = $region3
  $region8: #{tpu_custom_call.1} parent=0 // loop_exit
    _

</llo_original>
